<compile_context>
chip_gen: v7x
topology: tpu7x:2x2x1
jax: 0.10.0
libtpu: 0.0.40
codegen_flags: <defaults>
</compile_context>

<pallas_src>
import jax
import jax.numpy as jnp
from jax.experimental import pallas as pl
from jax.experimental.pallas import tpu as pltpu


def _round_up(x, m):
    return (x + m - 1) // m * m


def _fused_heads_kernel(x_ref, w_ref, b_ref, out_ref):
    """One fused projection for all three heads.

    x_ref:   (TILE_N, E)   bf16 activation tile
    w_ref:   (E, O_pad)    bf16 fused (pos|ne|sent) weights, zero-padded
    b_ref:   (1, O_pad)    f32 fused bias, zero-padded
    out_ref: (TILE_N, O_pad) f32
    """
    out_ref[...] = (
        jnp.dot(x_ref[...], w_ref[...], preferred_element_type=jnp.float32)
        + b_ref[...]
    )


def multitask_tagger_heads(embedded, params, *, tile_n=512):
    """Apply fused fc_pos / fc_ne / fc_sent to embedded features [B, S, E]."""
    B, S, E = embedded.shape
    N = B * S
    x = embedded.reshape(N, E).astype(jnp.bfloat16)

    w_fused = params["fused_w"]            # (E, O_pad) bf16
    b_fused = params["fused_b"]            # (1, O_pad) f32
    o_pos, o_ne, o_sent = params["head_dims"]
    o_pad = w_fused.shape[1]

    # Row tile: multiple of 8 sublanes; pad N so every block is full.
    tile_n = min(tile_n, _round_up(N, 8))
    n_pad = _round_up(N, tile_n)
    if n_pad != N:
        x = jnp.pad(x, ((0, n_pad - N), (0, 0)))
    grid = (n_pad // tile_n,)

    cost = pl.CostEstimate(
        flops=2 * n_pad * E * o_pad,
        transcendentals=0,
        bytes_accessed=(n_pad * E * 2            # bf16 activations in
                        + E * o_pad * 2          # bf16 weights
                        + o_pad * 4              # f32 bias
                        + n_pad * o_pad * 4),    # f32 outputs
    )

    out = pl.pallas_call(
        _fused_heads_kernel,
        out_shape=jax.ShapeDtypeStruct((n_pad, o_pad), jnp.float32),
        grid=grid,
        in_specs=[
            pl.BlockSpec((tile_n, E), lambda i: (i, 0)),   # streamed rows
            pl.BlockSpec((E, o_pad), lambda i: (0, 0)),    # resident weights
            pl.BlockSpec((1, o_pad), lambda i: (0, 0)),    # resident bias
        ],
        out_specs=pl.BlockSpec((tile_n, o_pad), lambda i: (i, 0)),
        compiler_params=pltpu.CompilerParams(
            dimension_semantics=("parallel",),             # shard rows on v7x
        ),
        cost_estimate=cost,
    )(x, w_fused, b_fused)

    out = out[:N]                                          # drop row padding
    pos = out[:, :o_pos].reshape(B, S, o_pos)
    ne = out[:, o_pos:o_pos + o_ne].reshape(B, S, o_ne)
    sent = out[:, o_pos + o_ne:o_pos + o_ne + o_sent].reshape(B, S, o_sent)
    return pos, ne, sent


def init_params(key, embedding_dim, output_dims, vocab_size):
    """Deterministic synthetic parameter init (shapes match the nn.Module)."""
    ks = jax.random.split(key, 7)
    names = ["fc_pos", "fc_ne", "fc_sent"]
    bound = 1.0 / jnp.sqrt(embedding_dim)
    params = {}
    ws, bs = [], []
    for i, (name, odim) in enumerate(zip(names, output_dims)):
        # PyTorch nn.Linear weight is [out, in]; store transposed [in, out].
        w = jax.random.uniform(ks[2 * i], (embedding_dim, odim),
                               jnp.float32, -bound, bound)
        b = jax.random.uniform(ks[2 * i + 1], (1, odim),
                               jnp.float32, -bound, bound)
        params[name] = (w, b)
        ws.append(w)
        bs.append(b)

    # Fuse the three heads and zero-pad the output axis to 128 lanes.
    o_total = sum(output_dims)
    o_pad = _round_up(o_total, 128)
    w_fused = jnp.pad(jnp.concatenate(ws, axis=1),
                      ((0, 0), (0, o_pad - o_total))).astype(jnp.bfloat16)
    b_fused = jnp.pad(jnp.concatenate(bs, axis=1),
                      ((0, 0), (0, o_pad - o_total)))     # f32, zero-padded
    params["fused_w"] = w_fused
    params["fused_b"] = b_fused
    params["head_dims"] = tuple(output_dims)

    # Stand-in for the pretrained encoder: a token embedding table (bf16 so the
    # activation stream is already half-width; no wrapper-side f32 upcast).
    params["embed_table"] = jax.random.normal(
        ks[6], (vocab_size, embedding_dim)).astype(jnp.bfloat16)
    return params


def multitask_tagger_forward(token_batch, params):
    """token_batch: int32 [batch, seq] -> (pos_pred, ne_pred, sent_pred)."""
    # TODO(synk): real model runs a RoBERTa encoder here; using embedding lookup.
    embedded = params["embed_table"][token_batch]          # [B, S, E] (glue)
    return multitask_tagger_heads(embedded, params)        # Pallas hot path


if __name__ == "__main__":
    key = jax.random.PRNGKey(0)
    batch, seq = 2, 8
    embedding_dim = 32
    output_dims = (10, 10, 10)          # --outputdim default '10,10,10'
    vocab_size = 100

    k_tok, k_par = jax.random.split(key)
    params = init_params(k_par, embedding_dim, output_dims, vocab_size)
    token_batch = jax.random.randint(k_tok, (batch, seq), 0, vocab_size,
                                     dtype=jnp.int32)

    pos_pred, ne_pred, sent_pred = multitask_tagger_forward(token_batch, params)
    jax.block_until_ready((pos_pred, ne_pred, sent_pred))

    assert pos_pred.shape == (batch, seq, output_dims[0])
    assert ne_pred.shape == (batch, seq, output_dims[1])
    assert sent_pred.shape == (batch, seq, output_dims[2])

    # Cross-check against plain JAX reference (bf16 inputs, f32 accumulation).
    emb = params["embed_table"][token_batch].astype(jnp.float32)

    def ref_head(name):
        w = params[name][0].astype(jnp.bfloat16).astype(jnp.float32)
        b = params[name][1]
        return emb @ w + b

    ref_pos = ref_head("fc_pos")
    ref_ne = ref_head("fc_ne")
    ref_sent = ref_head("fc_sent")
    assert jnp.allclose(pos_pred, ref_pos, atol=1e-3, rtol=1e-3)
    assert jnp.allclose(ne_pred, ref_ne, atol=1e-3, rtol=1e-3)
    assert jnp.allclose(sent_pred, ref_sent, atol=1e-3, rtol=1e-3)

    print("KERNEL_OK")
</pallas_src>

<mosaic_0001>
module attributes {stable_mosaic.version = 11 : i64} {
  func.func @_fused_heads_kernel(%arg0: i32, %arg1: memref<16x32xbf16, #tpu.memory_space<vmem>>, %arg2: memref<32x128xbf16, #tpu.memory_space<vmem>>, %arg3: memref<1x128xf32, #tpu.memory_space<vmem>>, %arg4: memref<16x128xf32, #tpu.memory_space<vmem>>) attributes {dimension_semantics = [#tpu.dimension_semantics<parallel>], iteration_bounds = array<i64: 1>, scalar_prefetch = 0 : i64, scratch_operands = 0 : i64, tpu.core_type = #tpu.core_type<tc>, window_params = [{transform_indices = @transform_0, window_bounds = array<i64: 16, 32>}, {pipeline_mode = #tpu.pipeline_mode<synchronous>, transform_indices = @transform_1, window_bounds = array<i64: 32, 128>}, {pipeline_mode = #tpu.pipeline_mode<synchronous>, transform_indices = @transform_2, window_bounds = array<i64: 1, 128>}, {transform_indices = @transform_3, window_bounds = array<i64: 16, 128>}]} {
    %c0 = arith.constant 0 : index
    %c0_0 = arith.constant 0 : index
    %0 = vector.load %arg1[%c0, %c0_0] : memref<16x32xbf16, #tpu.memory_space<vmem>>, vector<16x32xbf16>
    %c0_1 = arith.constant 0 : index
    %c0_2 = arith.constant 0 : index
    %1 = vector.load %arg2[%c0_1, %c0_2] : memref<32x128xbf16, #tpu.memory_space<vmem>>, vector<32x128xbf16>
    %cst = arith.constant dense<0.000000e+00> : vector<16x128xf32>
    %2 = tpu.matmul %0, %1, %cst {dimension_numbers = #tpu.dot_dimension_numbers<[1], [0], [0], [1], [0, 0, 1, 1], [], []>} : vector<16x32xbf16>, vector<32x128xbf16>, vector<16x128xf32> -> vector<16x128xf32>
    %c0_3 = arith.constant 0 : index
    %c0_4 = arith.constant 0 : index
    %3 = vector.load %arg3[%c0_3, %c0_4] : memref<1x128xf32, #tpu.memory_space<vmem>>, vector<1x128xf32>
    %4 = vector.broadcast %3 : vector<1x128xf32> to vector<16x128xf32>
    %5 = arith.addf %2, %4 : vector<16x128xf32>
    %c0_5 = arith.constant 0 : index
    %c0_6 = arith.constant 0 : index
    %6 = vector.load %arg4[%c0_5, %c0_6] : memref<16x128xf32, #tpu.memory_space<vmem>>, vector<16x128xf32>
    tpu.vector_store %arg4[%c0_5, %c0_6], %5 {strides = array<i32>} : memref<16x128xf32, #tpu.memory_space<vmem>>, vector<16x128xf32>,
    return
  }
  func.func @transform_0(%arg0: i32) -> (i32, i32) {
    %c0_i32 = arith.constant 0 : i32
    %c0_i32_0 = arith.constant 0 : i32
    return %arg0, %c0_i32 : i32, i32
  }
  func.func @transform_1(%arg0: i32) -> (i32, i32) {
    %c0_i32 = arith.constant 0 : i32
    %c0_i32_0 = arith.constant 0 : i32
    %c0_i32_1 = arith.constant 0 : i32
    return %c0_i32, %c0_i32_0 : i32, i32
  }
  func.func @transform_2(%arg0: i32) -> (i32, i32) {
    %c0_i32 = arith.constant 0 : i32
    %c0_i32_0 = arith.constant 0 : i32
    %c0_i32_1 = arith.constant 0 : i32
    return %c0_i32, %c0_i32_0 : i32, i32
  }
  func.func @transform_3(%arg0: i32) -> (i32, i32) {
    %c0_i32 = arith.constant 0 : i32
    %c0_i32_0 = arith.constant 0 : i32
    return %arg0, %c0_i32 : i32, i32
  }
}

</mosaic_0001>

<llo_original>
// kernel: tpu_custom_call.1
$region0: #{tpu_custom_call.1}
  #allocation0 [shape = 'u32[]', space=smem, size = 0x4, offset = 0x4, fixed_abs, tag = 'smem constant byte address 0x4 - core index']
  #allocation1 [shape = 'u32[144,128]{1,0:T(1,128)}', space=vmem, size = 0x12000, scoped, tag = 'internal scratch']
  %s0 = inlined_call_operand.hbm [shape: bf16[16,32], index: 0, kind: input, shape index: {}]
  %s1 = inlined_call_operand.hbm [shape: bf16[32,128], index: 1, kind: input, shape index: {}]
  %s2 = inlined_call_operand.vmem [shape: f32[1,128], index: 2, kind: input, shape index: {}]
  %s3 = inlined_call_operand.hbm [shape: f32[16,128], index: 3, kind: output, shape index: {}]
  %s4 = sld [smem:[#allocation0]]
  $region30: #{tpu_custom_call.1} parent=0
    _
  %s6 = ssub.s32 1, %s4
  %s7 = scalar_select 0, %s6, %s4
  $region1: #{tpu_custom_call.1} parent=0
    #allocation2 [shape = 'u8[4096]{0}', space=vmem, size = 0x1000, scoped, tag = 'input window, operand 0, single buffered']
    #allocation3 [shape = 's32[1]{0}', space=sflag, size = 0x4, scoped, tag = 'scoped memory for tpu_custom_call.1']
    #allocation4 [shape = 's32[1]{0}', space=sflag, size = 0x4, scoped, tag = 'scoped memory for tpu_custom_call.1']
    #allocation5 [shape = 'u8[8192]{0}', space=vmem, size = 0x2000, scoped, tag = 'input window, operand 1, single buffered']
    #allocation6 [shape = 's32[1]{0}', space=sflag, size = 0x4, scoped, tag = 'scoped memory for tpu_custom_call.1']
    #allocation7 [shape = 'u8[8192]{0}', space=vmem, size = 0x2000, scoped, tag = 'output window, operand 0, single buffered']
    %8 = vsyncpa [#allocation3], 0
    %9 = vsyncpa [#allocation6], 0
    %10 = vsyncpa [#allocation4], 0
    // Predicated region
    $region2: #{tpu_custom_call.1} parent=1 // pred_check
      _
    $region3: #{tpu_custom_call.1} parent=1 // pred_check_branch
      %12 = sbr.rel (0) target = $region5
    $region4: #{tpu_custom_call.1} parent=1 // pred_region
      %s14 = ssub.s32 128, 128
      %15 = vsyncadd [#allocation3], %s14
      %s16 = sshll.u32 [#allocation2], 4
      %s17 = int_to_ptr.vmem [resolvable:$true] %s16
      %22 = dma.hbm_to_vmem [thread:$0]  %s0, 128, %s17, [#allocation3], 64, 64, 4
    $region5: #{tpu_custom_call.1} parent=1 // pred_fallthru
      _
    // Predicated region
    $region6: #{tpu_custom_call.1} parent=1 // pred_check
      _
    $region7: #{tpu_custom_call.1} parent=1 // pred_check_branch
      %24 = sbr.rel (0) target = $region9
    $region8: #{tpu_custom_call.1} parent=1 // pred_region
      %s26 = ssub.s32 256, 256
      %27 = vsyncadd [#allocation6], %s26
      %s28 = sshll.u32 [#allocation5], 4
      %s29 = int_to_ptr.vmem [resolvable:$true] %s28
      %34 = dma.hbm_to_vmem [thread:$0]  %s1, 256, %s29, [#allocation6], 64, 64, 4
    $region9: #{tpu_custom_call.1} parent=1 // pred_fallthru
      _
    // Predicated region
    $region10: #{tpu_custom_call.1} parent=1 // pred_check
      _
    $region11: #{tpu_custom_call.1} parent=1 // pred_check_branch
      %36 = sbr.rel (0) target = $region13
    $region12: #{tpu_custom_call.1} parent=1 // pred_region
      _
    $region13: #{tpu_custom_call.1} parent=1 // pred_fallthru
      _
    // Predicated region
    $region14: #{tpu_custom_call.1} parent=1 // pred_check
      _
    $region15: #{tpu_custom_call.1} parent=1 // pred_check_branch
      %38 = sbr.rel (0) target = $region17
    $region16: #{tpu_custom_call.1} parent=1 // pred_region
      %39 = dma.done [#allocation3], 128
    $region17: #{tpu_custom_call.1} parent=1 // pred_fallthru
      _
    // Predicated region
    $region18: #{tpu_custom_call.1} parent=1 // pred_check
      _
    $region19: #{tpu_custom_call.1} parent=1 // pred_check_branch
      %41 = sbr.rel (0) target = $region21
    $region20: #{tpu_custom_call.1} parent=1 // pred_region
      %42 = dma.done [#allocation6], 256
    $region21: #{tpu_custom_call.1} parent=1 // pred_fallthru
      _
    %v44 = vld [vmem:[#allocation2] sm:$0xf]
    %v45 = vld [vmem:[#allocation2 + $0x4] sm:$0xf]
    %v46 = vld [vmem:[#allocation5] sm:$0xf]
    %v47 = vld [vmem:[#allocation5 + $0x4] sm:$0xf]
    %v48 = vld [vmem:[#allocation5 + $0x8] sm:$0xf]
    %v49 = vld [vmem:[#allocation5 + $0xc] sm:$0xf]
    %v50 = vld [vmem:[%s2] sm:$0x1]
    %v52 = vlaneseq
    %v53 = vshrl.u32 %v52, 7
    %v54 = vsub.s32 0, %v53
    %v55 = vrot.slane %v50, %v54
    %v59 = vunpack.c.l.b16 %v44
    %v60 = vunpack.c.l.b16 %v45
    %v61 = vpack.c.b16 %v60, %v59
    %v66 = vunpack.c.l.b16 %v46
    %v67 = vunpack.c.l.b16 %v47
    %v68 = vunpack.c.l.b16 %v48
    %v69 = vunpack.c.l.b16 %v49
    %v70 = vpack.c.b16 %v67, %v66
    %v71 = vpack.c.b16 %v69, %v68
    %vm74 = vcmask 261120
    %v76 = vsel %vm74, %v61, 0
    %78 = vmatprep.subr.bf16.mxu0 0
    %79 = vmatpush1.bf16.msra.mxu0 %v70
    %80 = vmatprep.subr.bf16.mxu0 0
    %81 = vmatpush1.bf16.msra.mxu0 %v71
    %82 = vmatprep.subr.bf16.mxu0 0
    %83 = vmatpush1.bf16.msra.mxu0 0
    %84 = vmatprep.subr.bf16.mxu0 0
    %85 = vmatpush1.bf16.msra.mxu0 0
    %86 = vmatprep.subr.bf16.mxu0 0
    %87 = vmatpush1.bf16.msra.mxu0 0
    %88 = vmatprep.subr.bf16.mxu0 0
    %89 = vmatpush1.bf16.msra.mxu0 0
    %90 = vmatprep.subr.bf16.mxu0 0
    %91 = vmatpush1.bf16.msra.mxu0 0
    %92 = vmatprep.subr.bf16.mxu0 0
    %93 = vmatpush1.bf16.msra.mxu0 0
    %94 = vmatprep.subr.bf16.mxu0 0
    %95 = vmatpush1.bf16.msra.mxu0 0
    %96 = vmatprep.subr.bf16.mxu0 0
    %97 = vmatpush1.bf16.msra.mxu0 0
    %98 = vmatprep.subr.bf16.mxu0 0
    %99 = vmatpush1.bf16.msra.mxu0 0
    %100 = vmatprep.subr.bf16.mxu0 0
    %101 = vmatpush1.bf16.msra.mxu0 0
    %102 = vmatprep.subr.bf16.mxu0 0
    %103 = vmatpush1.bf16.msra.mxu0 0
    %104 = vmatprep.subr.bf16.mxu0 0
    %105 = vmatpush1.bf16.msra.mxu0 0
    %106 = vmatprep.subr.bf16.mxu0 0
    %107 = vmatpush1.bf16.msra.mxu0 0
    %108 = vmatprep.subr.bf16.mxu0 0
    %109 = vmatpush1.bf16.msra.mxu0 0
    %110 = vmatprep.mubr.bf16.mxu0 0
    %111 = vmatmul.mubr.bf16.gmra.mrb[0].mxu0 %v76
    %v112 = vpop.f32.mrb[0].mxu0
    %v113 = vadd.f32 %v55, %v112
    %v114 = vpop.f32.mrb[0].mxu0
    %v115 = vpop.f32.mrb[0].mxu0
    %v116 = vadd.f32 %v55, %v115
    %v117 = vpop.f32.mrb[0].mxu0
    %118 = vdwg.mxu0
    %119 = vst [vmem:[#allocation7] sm:$0xff] %v113
    %120 = vst [vmem:[#allocation7 + $0x8] sm:$0xff] %v116
    // Predicated region
    $region22: #{tpu_custom_call.1} parent=1 // pred_check
      _
    $region23: #{tpu_custom_call.1} parent=1 // pred_check_branch
      %122 = sbr.rel (0) target = $region25
    $region24: #{tpu_custom_call.1} parent=1 // pred_region
      %s124 = ssub.s32 256, 256
      %125 = vsyncadd [#allocation4], %s124
      %s126 = sshll.u32 [#allocation7], 4
      %s127 = int_to_ptr.vmem [resolvable:$true] %s126
      %132 = dma.vmem_to_hbm [thread:$0]  %s127, 256, %s3, [#allocation4], 128, 128, 8
    $region25: #{tpu_custom_call.1} parent=1 // pred_fallthru
      _
    // Predicated region
    $region26: #{tpu_custom_call.1} parent=1 // pred_check
      _
    $region27: #{tpu_custom_call.1} parent=1 // pred_check_branch
      %134 = sbr.rel (0) target = $region29
    $region28: #{tpu_custom_call.1} parent=1 // pred_region
      %135 = dma.done [#allocation4], 256
    $region29: #{tpu_custom_call.1} parent=1 // pred_fallthru
      _
    %136 = vsyncpa [#allocation3], 1
    %137 = vsyncpa [#allocation6], 1
    %138 = vsyncpa [#allocation4], 1

</llo_original>
